<compile_context>
chip_gen: v5e
topology: v5e:2x2
jax: 0.10.0
libtpu: 0.0.40
codegen_flags: <defaults>
</compile_context>

<pallas_src>
import math

import numpy as np
import jax
import jax.numpy as jnp
from jax.experimental import pallas as pl
from jax.experimental.pallas import tpu as pltpu

D_MODEL = 16
EPS = 1e-5
LANES = 128                       # vreg lane width
TOK_PER_ROW = LANES // D_MODEL    # 8 tokens packed per 128-lane row
MAX_BLOCK_ROWS = 4096             # 4096*128*4B = 2 MiB per f32 buffer
SPLIT_THRESHOLD_ROWS = 512        # above this, force grid >= 2 (v7x dual-TC sharding)

# Block-diagonal group-mean matrix, built once at module scope:
#   gm[i, j] = 1/16 if i//16 == j//16 else 0
_lane = np.arange(LANES)
_grp = _lane // D_MODEL
_GM_NP = ((_grp[:, None] == _grp[None, :]).astype(np.float32) / D_MODEL)


def _round_up(a, m):
    return -(-a // m) * m


# -------------------------------------------------------------------------
# Kernel
# -------------------------------------------------------------------------
def layernorm_kernel(x_ref, gm_ref, g_ref, b_ref, o_ref):
    # x_ref : (BR, 128)   8 tokens x 16 features per lane-dense row (f32 or bf16)
    # gm_ref: (128, 128)  block-diagonal group-mean matrix (f32)
    # g_ref : (1, 128)    gamma tiled 8x along lanes (f32)
    # b_ref : (1, 128)    beta  tiled 8x along lanes (f32)
    x = x_ref[...].astype(jnp.float32)
    gm = gm_ref[...]

    # per-token mean, broadcast to every lane of that token's 16-lane group (MXU).
    # precision=HIGHEST -> f32 multi-pass matmul, no silent bf16 truncation.
    mean = jnp.dot(x, gm, preferred_element_type=jnp.float32,
                   precision=jax.lax.Precision.HIGHEST)
    c = x - mean
    # biased variance (torch var(unbiased=False)), same broadcast trick (MXU)
    var = jnp.dot(c * c, gm, preferred_element_type=jnp.float32,
                  precision=jax.lax.Precision.HIGHEST)
    inv = jax.lax.rsqrt(var + EPS)          # EUP slot, off the VALU critical path

    # single lane-dense (unmasked) store, back in the I/O dtype
    o_ref[...] = (g_ref[...] * (c * inv) + b_ref[...]).astype(o_ref.dtype)


# -------------------------------------------------------------------------
# Wrapper
# -------------------------------------------------------------------------
def layer_norm(x, gamma, beta):
    """LayerNorm over the last dim (= D_MODEL). x: (..., D_MODEL), f32 or bf16."""
    orig_shape = x.shape
    d = orig_shape[-1]
    assert d == D_MODEL and LANES % d == 0

    io_dtype = x.dtype if x.dtype in (jnp.bfloat16, jnp.float32) else jnp.float32
    sublane = 16 if io_dtype == jnp.bfloat16 else 8   # packed bf16 tiles as (16,128)

    n_tok = math.prod(orig_shape[:-1]) if len(orig_shape) > 1 else 1
    x_flat = x.reshape(n_tok, d).astype(io_dtype)

    # Pad tokens only up to the sublane tile (<= 127 tokens), never to a block
    # multiple — ragged last grid blocks are masked by Pallas.
    rows_raw = -(-n_tok // TOK_PER_ROW)
    rows = max(sublane, _round_up(rows_raw, sublane))
    pad_tok = rows * TOK_PER_ROW - n_tok
    if pad_tok:
        x_flat = jnp.pad(x_flat, ((0, pad_tok), (0, 0)))
    x_rows = x_flat.reshape(rows, LANES)    # contiguous reshape: token-major packing

    # Block sizing: one big block for small inputs (latency); for large inputs force
    # >= 2 grid steps so both v7x TensorCores get work, capped at 2 MiB blocks.
    if rows <= SPLIT_THRESHOLD_ROWS:
        block_rows = rows
    else:
        half = _round_up((rows + 1) // 2, sublane)
        block_rows = max(sublane, min(MAX_BLOCK_ROWS, half))
    grid = pl.cdiv(rows, block_rows)

    gm = jnp.asarray(_GM_NP)
    gamma_t = jnp.tile(gamma.reshape(-1).astype(jnp.float32), TOK_PER_ROW).reshape(1, LANES)
    beta_t = jnp.tile(beta.reshape(-1).astype(jnp.float32), TOK_PER_ROW).reshape(1, LANES)

    out = pl.pallas_call(
        layernorm_kernel,
        out_shape=jax.ShapeDtypeStruct((rows, LANES), io_dtype),
        grid_spec=pltpu.PrefetchScalarGridSpec(
            num_scalar_prefetch=0,
            grid=(grid,),
            in_specs=[
                pl.BlockSpec((block_rows, LANES), lambda i: (i, 0)),
                pl.BlockSpec((LANES, LANES), lambda i: (0, 0)),
                pl.BlockSpec((1, LANES), lambda i: (0, 0)),
                pl.BlockSpec((1, LANES), lambda i: (0, 0)),
            ],
            out_specs=pl.BlockSpec((block_rows, LANES), lambda i: (i, 0)),
        ),
        compiler_params=pltpu.CompilerParams(
            dimension_semantics=("parallel",),
        ),
    )(x_rows, gm, gamma_t, beta_t)

    out_flat = out.reshape(rows * TOK_PER_ROW, d)
    if pad_tok:
        out_flat = out_flat[:n_tok]
    return out_flat.reshape(orig_shape).astype(x.dtype)


# -------------------------------------------------------------------------
# Pure-JAX reference (correctness check)
# -------------------------------------------------------------------------
def ref_layer_norm(x, gamma, beta):
    xf = x.astype(jnp.float32)
    mean = jnp.mean(xf, axis=-1, keepdims=True)
    var = jnp.mean((xf - mean) ** 2, axis=-1, keepdims=True)   # biased, matches torch
    return (gamma * ((xf - mean) / jnp.sqrt(var + EPS)) + beta).astype(x.dtype)


# -------------------------------------------------------------------------
if __name__ == "__main__":
    key = jax.random.PRNGKey(0)
    kx, kg, kb, kx2 = jax.random.split(key, 4)

    # learnable params (module initializes ones/zeros; perturb to exercise scale/shift)
    gamma = 1.0 + 0.1 * jax.random.normal(kg, (D_MODEL,), jnp.float32)
    beta = 0.1 * jax.random.normal(kb, (D_MODEL,), jnp.float32)

    # Case 1: lane-dense, no padding (B=2, S=64 -> 128 tokens)
    B, S = 2, 64
    x = jax.random.normal(kx, (B, S, D_MODEL), jnp.float32)
    out = jax.block_until_ready(layer_norm(x, gamma, beta))
    ref = ref_layer_norm(x, gamma, beta)
    assert out.shape == x.shape, out.shape
    err = float(jnp.max(jnp.abs(out - ref)))
    assert err < 1e-4, err

    # Case 2: ragged token count (exercises the sublane-tile pad / unpad path)
    x2 = jax.random.normal(kx2, (3, 5, D_MODEL), jnp.float32)
    out2 = jax.block_until_ready(layer_norm(x2, gamma, beta))
    ref2 = ref_layer_norm(x2, gamma, beta)
    assert out2.shape == x2.shape, out2.shape
    err2 = float(jnp.max(jnp.abs(out2 - ref2)))
    assert err2 < 1e-4, err2

    print("KERNEL_OK")
</pallas_src>

<mosaic_0001>
module attributes {stable_mosaic.version = 11 : i64} {
  func.func @layernorm_kernel(%arg0: i32, %arg1: memref<16x128xf32, #tpu.memory_space<vmem>>, %arg2: memref<128x128xf32, #tpu.memory_space<vmem>>, %arg3: memref<1x128xf32, #tpu.memory_space<vmem>>, %arg4: memref<1x128xf32, #tpu.memory_space<vmem>>, %arg5: memref<16x128xf32, #tpu.memory_space<vmem>>) attributes {dimension_semantics = [#tpu.dimension_semantics<parallel>], iteration_bounds = array<i64: 1>, scalar_prefetch = 0 : i64, scratch_operands = 0 : i64, tpu.core_type = #tpu.core_type<tc>, window_params = [{transform_indices = @transform_0, window_bounds = array<i64: 16, 128>}, {pipeline_mode = #tpu.pipeline_mode<synchronous>, transform_indices = @transform_1, window_bounds = array<i64: 128, 128>}, {pipeline_mode = #tpu.pipeline_mode<synchronous>, transform_indices = @transform_2, window_bounds = array<i64: 1, 128>}, {pipeline_mode = #tpu.pipeline_mode<synchronous>, transform_indices = @transform_3, window_bounds = array<i64: 1, 128>}, {transform_indices = @transform_4, window_bounds = array<i64: 16, 128>}]} {
    %c0 = arith.constant 0 : index
    %c0_0 = arith.constant 0 : index
    %0 = vector.load %arg1[%c0, %c0_0] : memref<16x128xf32, #tpu.memory_space<vmem>>, vector<16x128xf32>
    %c0_1 = arith.constant 0 : index
    %c0_2 = arith.constant 0 : index
    %1 = vector.load %arg2[%c0_1, %c0_2] : memref<128x128xf32, #tpu.memory_space<vmem>>, vector<128x128xf32>
    %cst = arith.constant dense<0.000000e+00> : vector<16x128xf32>
    %2 = tpu.matmul %0, %1, %cst {dimension_numbers = #tpu.dot_dimension_numbers<[1], [0], [0], [1], [0, 0, 1, 1], [], []>, precision = #tpu.contract_precision<fp32>} : vector<16x128xf32>, vector<128x128xf32>, vector<16x128xf32> -> vector<16x128xf32>
    %3 = arith.subf %0, %2 : vector<16x128xf32>
    %4 = arith.mulf %3, %3 : vector<16x128xf32>
    %cst_3 = arith.constant dense<0.000000e+00> : vector<16x128xf32>
    %5 = tpu.matmul %4, %1, %cst_3 {dimension_numbers = #tpu.dot_dimension_numbers<[1], [0], [0], [1], [0, 0, 1, 1], [], []>, precision = #tpu.contract_precision<fp32>} : vector<16x128xf32>, vector<128x128xf32>, vector<16x128xf32> -> vector<16x128xf32>
    %cst_4 = arith.constant 9.99999974E-6 : f32
    %6 = vector.broadcast %cst_4 : f32 to vector<16x128xf32>
    %7 = arith.addf %5, %6 : vector<16x128xf32>
    %8 = math.rsqrt %7 : vector<16x128xf32>
    %c0_5 = arith.constant 0 : index
    %c0_6 = arith.constant 0 : index
    %9 = vector.load %arg3[%c0_5, %c0_6] : memref<1x128xf32, #tpu.memory_space<vmem>>, vector<1x128xf32>
    %10 = arith.mulf %3, %8 : vector<16x128xf32>
    %11 = vector.broadcast %9 : vector<1x128xf32> to vector<16x128xf32>
    %12 = arith.mulf %11, %10 : vector<16x128xf32>
    %c0_7 = arith.constant 0 : index
    %c0_8 = arith.constant 0 : index
    %13 = vector.load %arg4[%c0_7, %c0_8] : memref<1x128xf32, #tpu.memory_space<vmem>>, vector<1x128xf32>
    %14 = vector.broadcast %13 : vector<1x128xf32> to vector<16x128xf32>
    %15 = arith.addf %12, %14 : vector<16x128xf32>
    %c0_9 = arith.constant 0 : index
    %c0_10 = arith.constant 0 : index
    %16 = vector.load %arg5[%c0_9, %c0_10] : memref<16x128xf32, #tpu.memory_space<vmem>>, vector<16x128xf32>
    tpu.vector_store %arg5[%c0_9, %c0_10], %15 {strides = array<i32>} : memref<16x128xf32, #tpu.memory_space<vmem>>, vector<16x128xf32>,
    return
  }
  func.func @transform_0(%arg0: i32) -> (i32, i32) {
    %c0_i32 = arith.constant 0 : i32
    %c0_i32_0 = arith.constant 0 : i32
    return %arg0, %c0_i32 : i32, i32
  }
  func.func @transform_1(%arg0: i32) -> (i32, i32) {
    %c0_i32 = arith.constant 0 : i32
    %c0_i32_0 = arith.constant 0 : i32
    %c0_i32_1 = arith.constant 0 : i32
    return %c0_i32, %c0_i32_0 : i32, i32
  }
  func.func @transform_2(%arg0: i32) -> (i32, i32) {
    %c0_i32 = arith.constant 0 : i32
    %c0_i32_0 = arith.constant 0 : i32
    %c0_i32_1 = arith.constant 0 : i32
    return %c0_i32, %c0_i32_0 : i32, i32
  }
  func.func @transform_3(%arg0: i32) -> (i32, i32) {
    %c0_i32 = arith.constant 0 : i32
    %c0_i32_0 = arith.constant 0 : i32
    %c0_i32_1 = arith.constant 0 : i32
    return %c0_i32, %c0_i32_0 : i32, i32
  }
  func.func @transform_4(%arg0: i32) -> (i32, i32) {
    %c0_i32 = arith.constant 0 : i32
    %c0_i32_0 = arith.constant 0 : i32
    return %arg0, %c0_i32 : i32, i32
  }
}

</mosaic_0001>

<llo_original>
// kernel: tpu_custom_call.1
$region0: #{tpu_custom_call.1}
  #allocation0 [shape = 'u32[]', space=smem, size = 0x4, offset = 0x4, fixed_abs, tag = 'smem constant byte address 0x4 - core index']
  #allocation1 [shape = 'u32[72,128]{1,0:T(1,128)}', space=vmem, size = 0x9000, scoped, tag = 'internal scratch']
  %s0 = inlined_call_operand.hbm [shape: f32[16,128], index: 0, kind: input, shape index: {}]
  %s1 = inlined_call_operand.hbm [shape: f32[128,128], index: 1, kind: input, shape index: {}]
  %s2 = inlined_call_operand.vmem [shape: f32[1,128], index: 2, kind: input, shape index: {}]
  %s3 = inlined_call_operand.vmem [shape: f32[1,128], index: 3, kind: input, shape index: {}]
  %s4 = inlined_call_operand.hbm [shape: f32[16,128], index: 4, kind: output, shape index: {}]
  %s5 = sld [smem:[#allocation0]]
  $region34: #{tpu_custom_call.1} parent=0
    _
  %s7 = ssub.s32 1, %s5
  %s8 = scalar_select 0, %s7, %s5
  $region1: #{tpu_custom_call.1} parent=0
    #allocation2 [shape = 'u8[8192]{0}', space=vmem, size = 0x2000, scoped, tag = 'input window, operand 0, single buffered']
    #allocation3 [shape = 's32[1]{0}', space=sflag, size = 0x4, scoped, tag = 'scoped memory for tpu_custom_call.1']
    #allocation4 [shape = 's32[1]{0}', space=sflag, size = 0x4, scoped, tag = 'scoped memory for tpu_custom_call.1']
    #allocation5 [shape = 'u8[65536]{0}', space=vmem, size = 0x10000, scoped, tag = 'input window, operand 1, single buffered']
    #allocation6 [shape = 's32[1]{0}', space=sflag, size = 0x4, scoped, tag = 'scoped memory for tpu_custom_call.1']
    #allocation7 [shape = 'u8[8192]{0}', space=vmem, size = 0x2000, scoped, tag = 'output window, operand 0, single buffered']
    %9 = vsyncpa [#allocation3], 0
    %10 = vsyncpa [#allocation6], 0
    %11 = vsyncpa [#allocation4], 0
    // Predicated region
    $region2: #{tpu_custom_call.1} parent=1 // pred_check
      _
    $region3: #{tpu_custom_call.1} parent=1 // pred_check_branch
      %13 = sbr.rel (0) target = $region5
    $region4: #{tpu_custom_call.1} parent=1 // pred_region
      %15 = vsyncadd [#allocation3], 0
      %s16 = sshll.u32 %s0, 4
      %s17 = int_to_ptr.hbm [resolvable:$true] %s16
      %s18 = sshll.u32 [#allocation2], 4
      %s19 = int_to_ptr.vmem [resolvable:$true] %s18
      %24 = dma.hbm_to_vmem [thread:$0]  %s17, 256, %s19, [#allocation3], 128, 128, 8
    $region5: #{tpu_custom_call.1} parent=1 // pred_fallthru
      _
    // Predicated region
    $region6: #{tpu_custom_call.1} parent=1 // pred_check
      _
    $region7: #{tpu_custom_call.1} parent=1 // pred_check_branch
      %26 = sbr.rel (0) target = $region9
    $region8: #{tpu_custom_call.1} parent=1 // pred_region
      %28 = vsyncadd [#allocation6], 0
      %s29 = sshll.u32 %s1, 4
      %s30 = int_to_ptr.hbm [resolvable:$true] %s29
      %s31 = sshll.u32 [#allocation5], 4
      %s32 = int_to_ptr.vmem [resolvable:$true] %s31
      %37 = dma.hbm_to_vmem [thread:$0]  %s30, 2048, %s32, [#allocation6], 128, 128, 8
    $region9: #{tpu_custom_call.1} parent=1 // pred_fallthru
      _
    // Predicated region
    $region10: #{tpu_custom_call.1} parent=1 // pred_check
      _
    $region11: #{tpu_custom_call.1} parent=1 // pred_check_branch
      %39 = sbr.rel (0) target = $region13
    $region12: #{tpu_custom_call.1} parent=1 // pred_region
      _
    $region13: #{tpu_custom_call.1} parent=1 // pred_fallthru
      _
    // Predicated region
    $region14: #{tpu_custom_call.1} parent=1 // pred_check
      _
    $region15: #{tpu_custom_call.1} parent=1 // pred_check_branch
      %41 = sbr.rel (0) target = $region17
    $region16: #{tpu_custom_call.1} parent=1 // pred_region
      _
    $region17: #{tpu_custom_call.1} parent=1 // pred_fallthru
      _
    // Predicated region
    $region18: #{tpu_custom_call.1} parent=1 // pred_check
      _
    $region19: #{tpu_custom_call.1} parent=1 // pred_check_branch
      %43 = sbr.rel (0) target = $region21
    $region20: #{tpu_custom_call.1} parent=1 // pred_region
      %45 = dma.done [#allocation3], 256
    $region21: #{tpu_custom_call.1} parent=1 // pred_fallthru
      _
    // Predicated region
    $region22: #{tpu_custom_call.1} parent=1 // pred_check
      _
    $region23: #{tpu_custom_call.1} parent=1 // pred_check_branch
      %47 = sbr.rel (0) target = $region25
    $region24: #{tpu_custom_call.1} parent=1 // pred_region
      %49 = dma.done [#allocation6], 2048
    $region25: #{tpu_custom_call.1} parent=1 // pred_fallthru
      _
    %v50 = vld [vmem:[#allocation2] sm:$0xff]
    %v51 = vld [vmem:[#allocation2 + $0x8] sm:$0xff]
    %v52 = vld [vmem:[#allocation5] sm:$0xff]
    %v53 = vld [vmem:[#allocation5 + $0x8] sm:$0xff]
    %v54 = vld [vmem:[#allocation5 + $0x10] sm:$0xff]
    %v55 = vld [vmem:[#allocation5 + $0x18] sm:$0xff]
    %v56 = vld [vmem:[#allocation5 + $0x20] sm:$0xff]
    %v57 = vld [vmem:[#allocation5 + $0x28] sm:$0xff]
    %v58 = vld [vmem:[#allocation5 + $0x30] sm:$0xff]
    %v59 = vld [vmem:[#allocation5 + $0x38] sm:$0xff]
    %v60 = vld [vmem:[#allocation5 + $0x40] sm:$0xff]
    %v61 = vld [vmem:[#allocation5 + $0x48] sm:$0xff]
    %v62 = vld [vmem:[#allocation5 + $0x50] sm:$0xff]
    %v63 = vld [vmem:[#allocation5 + $0x58] sm:$0xff]
    %v64 = vld [vmem:[#allocation5 + $0x60] sm:$0xff]
    %v65 = vld [vmem:[#allocation5 + $0x68] sm:$0xff]
    %v66 = vld [vmem:[#allocation5 + $0x70] sm:$0xff]
    %v67 = vld [vmem:[#allocation5 + $0x78] sm:$0xff]
    %v68 = vand.u32 %v67, 4294901760
    %69 = vmatpush.msra.mxu0 %v68
    %v70 = vand.u32 %v66, 4294901760
    %71 = vmatpush.msra.mxu0 %v70
    %v72 = vand.u32 %v65, 4294901760
    %73 = vmatpush.msra.mxu0 %v72
    %v74 = vand.u32 %v64, 4294901760
    %75 = vmatpush.msra.mxu0 %v74
    %v76 = vand.u32 %v63, 4294901760
    %77 = vmatpush.msra.mxu0 %v76
    %v78 = vand.u32 %v62, 4294901760
    %79 = vmatpush.msra.mxu0 %v78
    %v80 = vand.u32 %v61, 4294901760
    %81 = vmatpush.msra.mxu0 %v80
    %v82 = vand.u32 %v60, 4294901760
    %83 = vmatpush.msra.mxu0 %v82
    %v84 = vand.u32 %v59, 4294901760
    %85 = vmatpush.msra.mxu0 %v84
    %v86 = vand.u32 %v58, 4294901760
    %87 = vmatpush.msra.mxu0 %v86
    %v88 = vand.u32 %v57, 4294901760
    %89 = vmatpush.msra.mxu0 %v88
    %v90 = vand.u32 %v56, 4294901760
    %91 = vmatpush.msra.mxu0 %v90
    %v92 = vand.u32 %v55, 4294901760
    %93 = vmatpush.msra.mxu0 %v92
    %v94 = vand.u32 %v54, 4294901760
    %95 = vmatpush.msra.mxu0 %v94
    %v96 = vand.u32 %v53, 4294901760
    %97 = vmatpush.msra.mxu0 %v96
    %v98 = vand.u32 %v52, 4294901760
    %99 = vmatpush.msra.mxu0 %v98
    %v100 = vand.u32 %v50, 4294901760
    %v101 = vsub.f32 %v50, %v100
    %v102 = vand.u32 %v101, 4294901760
    %v103 = vsub.f32 %v101, %v102
    %v104 = vand.u32 %v103, 4294901760
    %105 = vmatmul.f32.gmra.mxu0 %v104
    %v106 = vpop.f32.mrf.mxu0
    %v107 = vadd.f32 0.0, %v106
    %v108 = vand.u32 %v51, 4294901760
    %v109 = vsub.f32 %v51, %v108
    %v110 = vand.u32 %v109, 4294901760
    %v111 = vsub.f32 %v109, %v110
    %v112 = vand.u32 %v111, 4294901760
    %113 = vmatmul.f32.gmra.mxu0 %v112
    %v114 = vpop.f32.mrf.mxu0
    %v115 = vadd.f32 0.0, %v114
    %116 = vdwg.mxu0
    %v117 = vand.u32 %v67, 4294901760
    %v118 = vsub.f32 %v67, %v117
    %v119 = vand.u32 %v118, 4294901760
    %v120 = vsub.f32 %v118, %v119
    %v121 = vand.u32 %v120, 4294901760
    %122 = vmatpush.msra.mxu0 %v121
    %v123 = vand.u32 %v66, 4294901760
    %v124 = vsub.f32 %v66, %v123
    %v125 = vand.u32 %v124, 4294901760
    %v126 = vsub.f32 %v124, %v125
    %v127 = vand.u32 %v126, 4294901760
    %128 = vmatpush.msra.mxu0 %v127
    %v129 = vand.u32 %v65, 4294901760
    %v130 = vsub.f32 %v65, %v129
    %v131 = vand.u32 %v130, 4294901760
    %v132 = vsub.f32 %v130, %v131
    %v133 = vand.u32 %v132, 4294901760
    %134 = vmatpush.msra.mxu0 %v133
    %v135 = vand.u32 %v64, 4294901760
    %v136 = vsub.f32 %v64, %v135
    %v137 = vand.u32 %v136, 4294901760
    %v138 = vsub.f32 %v136, %v137
    %v139 = vand.u32 %v138, 4294901760
    %140 = vmatpush.msra.mxu0 %v139
    %v141 = vand.u32 %v63, 4294901760
    %v142 = vsub.f32 %v63, %v141
    %v143 = vand.u32 %v142, 4294901760
    %v144 = vsub.f32 %v142, %v143
    %v145 = vand.u32 %v144, 4294901760
    %146 = vmatpush.msra.mxu0 %v145
    %v147 = vand.u32 %v62, 4294901760
    %v148 = vsub.f32 %v62, %v147
    %v149 = vand.u32 %v148, 4294901760
    %v150 = vsub.f32 %v148, %v149
    %v151 = vand.u32 %v150, 4294901760
    %152 = vmatpush.msra.mxu0 %v151
    %v153 = vand.u32 %v61, 4294901760
    %v154 = vsub.f32 %v61, %v153
    %v155 = vand.u32 %v154, 4294901760
    %v156 = vsub.f32 %v154, %v155
    %v157 = vand.u32 %v156, 4294901760
    %158 = vmatpush.msra.mxu0 %v157
    %v159 = vand.u32 %v60, 4294901760
    %v160 = vsub.f32 %v60, %v159
    %v161 = vand.u32 %v160, 4294901760
    %v162 = vsub.f32 %v160, %v161
    %v163 = vand.u32 %v162, 4294901760
    %164 = vmatpush.msra.mxu0 %v163
    %v165 = vand.u32 %v59, 4294901760
    %v166 = vsub.f32 %v59, %v165
    %v167 = vand.u32 %v166, 4294901760
    %v168 = vsub.f32 %v166, %v167
    %v169 = vand.u32 %v168, 4294901760
    %170 = vmatpush.msra.mxu0 %v169
    %v171 = vand.u32 %v58, 4294901760
    %v172 = vsub.f32 %v58, %v171
    %v173 = vand.u32 %v172, 4294901760
    %v174 = vsub.f32 %v172, %v173
    %v175 = vand.u32 %v174, 4294901760
    %176 = vmatpush.msra.mxu0 %v175
    %v177 = vand.u32 %v57, 4294901760
    %v178 = vsub.f32 %v57, %v177
    %v179 = vand.u32 %v178, 4294901760
    %v180 = vsub.f32 %v178, %v179
    %v181 = vand.u32 %v180, 4294901760
    %182 = vmatpush.msra.mxu0 %v181
    %v183 = vand.u32 %v56, 4294901760
    %v184 = vsub.f32 %v56, %v183
    %v185 = vand.u32 %v184, 4294901760
    %v186 = vsub.f32 %v184, %v185
    %v187 = vand.u32 %v186, 4294901760
    %188 = vmatpush.msra.mxu0 %v187
    %v189 = vand.u32 %v55, 4294901760
    %v190 = vsub.f32 %v55, %v189
    %v191 = vand.u32 %v190, 4294901760
    %v192 = vsub.f32 %v190, %v191
    %v193 = vand.u32 %v192, 4294901760
    %194 = vmatpush.msra.mxu0 %v193
    %v195 = vand.u32 %v54, 4294901760
    %v196 = vsub.f32 %v54, %v195
    %v197 = vand.u32 %v196, 4294901760
    %v198 = vsub.f32 %v196, %v197
    %v199 = vand.u32 %v198, 4294901760
    %200 = vmatpush.msra.mxu0 %v199
    %v201 = vand.u32 %v53, 4294901760
    %v202 = vsub.f32 %v53, %v201
    %v203 = vand.u32 %v202, 4294901760
    %v204 = vsub.f32 %v202, %v203
    %v205 = vand.u32 %v204, 4294901760
    %206 = vmatpush.msra.mxu0 %v205
    %v207 = vand.u32 %v52, 4294901760
    %v208 = vsub.f32 %v52, %v207
    %v209 = vand.u32 %v208, 4294901760
    %v210 = vsub.f32 %v208, %v209
    %v211 = vand.u32 %v210, 4294901760
    %212 = vmatpush.msra.mxu0 %v211
    %v213 = vand.u32 %v50, 4294901760
    %214 = vmatmul.f32.gmra.mxu0 %v213
    %v215 = vpop.f32.mrf.mxu0
    %v216 = vadd.f32 %v107, %v215
    %v217 = vand.u32 %v51, 4294901760
    %218 = vmatmul.f32.gmra.mxu0 %v217
    %v219 = vpop.f32.mrf.mxu0
    %v220 = vadd.f32 %v115, %v219
    %221 = vdwg.mxu0
    %v222 = vand.u32 %v67, 4294901760
    %v223 = vsub.f32 %v67, %v222
    %224 = vmatpush.msra.mxu0 %v223
    %v225 = vand.u32 %v66, 4294901760
    %v226 = vsub.f32 %v66, %v225
    %227 = vmatpush.msra.mxu0 %v226
    %v228 = vand.u32 %v65, 4294901760
    %v229 = vsub.f32 %v65, %v228
    %230 = vmatpush.msra.mxu0 %v229
    %v231 = vand.u32 %v64, 4294901760
    %v232 = vsub.f32 %v64, %v231
    %233 = vmatpush.msra.mxu0 %v232
    %v234 = vand.u32 %v63, 4294901760
    %v235 = vsub.f32 %v63, %v234
    %236 = vmatpush.msra.mxu0 %v235
    %v237 = vand.u32 %v62, 4294901760
    %v238 = vsub.f32 %v62, %v237
    %239 = vmatpush.msra.mxu0 %v238
    %v240 = vand.u32 %v61, 4294901760
    %v241 = vsub.f32 %v61, %v240
    %242 = vmatpush.msra.mxu0 %v241
    %v243 = vand.u32 %v60, 4294901760
    %v244 = vsub.f32 %v60, %v243
    %245 = vmatpush.msra.mxu0 %v244
    %v246 = vand.u32 %v59, 4294901760
    %v247 = vsub.f32 %v59, %v246
    %248 = vmatpush.msra.mxu0 %v247
    %v249 = vand.u32 %v58, 4294901760
    %v250 = vsub.f32 %v58, %v249
    %251 = vmatpush.msra.mxu0 %v250
    %v252 = vand.u32 %v57, 4294901760
    %v253 = vsub.f32 %v57, %v252
    %254 = vmatpush.msra.mxu0 %v253
    %v255 = vand.u32 %v56, 4294901760
    %v256 = vsub.f32 %v56, %v255
    %257 = vmatpush.msra.mxu0 %v256
    %v258 = vand.u32 %v55, 4294901760
    %v259 = vsub.f32 %v55, %v258
    %260 = vmatpush.msra.mxu0 %v259
    %v261 = vand.u32 %v54, 4294901760
    %v262 = vsub.f32 %v54, %v261
    %263 = vmatpush.msra.mxu0 %v262
    %v264 = vand.u32 %v53, 4294901760
    %v265 = vsub.f32 %v53, %v264
    %266 = vmatpush.msra.mxu0 %v265
    %v267 = vand.u32 %v52, 4294901760
    %v268 = vsub.f32 %v52, %v267
    %269 = vmatpush.msra.mxu0 %v268
    %v270 = vand.u32 %v50, 4294901760
    %v271 = vsub.f32 %v50, %v270
    %272 = vmatmul.f32.gmra.mxu0 %v271
    %v273 = vpop.f32.mrf.mxu0
    %v274 = vadd.f32 %v216, %v273
    %v275 = vand.u32 %v51, 4294901760
    %v276 = vsub.f32 %v51, %v275
    %277 = vmatmul.f32.gmra.mxu0 %v276
    %v278 = vpop.f32.mrf.mxu0
    %v279 = vadd.f32 %v220, %v278
    %280 = vdwg.mxu0
    %v281 = vand.u32 %v67, 4294901760
    %282 = vmatpush.msra.mxu0 %v281
    %v283 = vand.u32 %v66, 4294901760
    %284 = vmatpush.msra.mxu0 %v283
    %v285 = vand.u32 %v65, 4294901760
    %286 = vmatpush.msra.mxu0 %v285
    %v287 = vand.u32 %v64, 4294901760
    %288 = vmatpush.msra.mxu0 %v287
    %v289 = vand.u32 %v63, 4294901760
    %290 = vmatpush.msra.mxu0 %v289
    %v291 = vand.u32 %v62, 4294901760
    %292 = vmatpush.msra.mxu0 %v291
    %v293 = vand.u32 %v61, 4294901760
    %294 = vmatpush.msra.mxu0 %v293
    %v295 = vand.u32 %v60, 4294901760
    %296 = vmatpush.msra.mxu0 %v295
    %v297 = vand.u32 %v59, 4294901760
    %298 = vmatpush.msra.mxu0 %v297
    %v299 = vand.u32 %v58, 4294901760
    %300 = vmatpush.msra.mxu0 %v299
    %v301 = vand.u32 %v57, 4294901760
    %302 = vmatpush.msra.mxu0 %v301
    %v303 = vand.u32 %v56, 4294901760
    %304 = vmatpush.msra.mxu0 %v303
    %v305 = vand.u32 %v55, 4294901760
    %306 = vmatpush.msra.mxu0 %v305
    %v307 = vand.u32 %v54, 4294901760
    %308 = vmatpush.msra.mxu0 %v307
    %v309 = vand.u32 %v53, 4294901760
    %310 = vmatpush.msra.mxu0 %v309
    %v311 = vand.u32 %v52, 4294901760
    %312 = vmatpush.msra.mxu0 %v311
    %v313 = vand.u32 %v50, 4294901760
    %v314 = vsub.f32 %v50, %v313
    %v315 = vand.u32 %v314, 4294901760
    %316 = vmatmul.f32.gmra.mxu0 %v315
    %v317 = vpop.f32.mrf.mxu0
    %v318 = vadd.f32 %v274, %v317
    %v319 = vand.u32 %v51, 4294901760
    %v320 = vsub.f32 %v51, %v319
    %v321 = vand.u32 %v320, 4294901760
    %322 = vmatmul.f32.gmra.mxu0 %v321
    %v323 = vpop.f32.mrf.mxu0
    %v324 = vadd.f32 %v279, %v323
    %325 = vdwg.mxu0
    %v326 = vand.u32 %v67, 4294901760
    %v327 = vsub.f32 %v67, %v326
    %v328 = vand.u32 %v327, 4294901760
    %329 = vmatpush.msra.mxu0 %v328
    %v330 = vand.u32 %v66, 4294901760
    %v331 = vsub.f32 %v66, %v330
    %v332 = vand.u32 %v331, 4294901760
    %333 = vmatpush.msra.mxu0 %v332
    %v334 = vand.u32 %v65, 4294901760
    %v335 = vsub.f32 %v65, %v334
    %v336 = vand.u32 %v335, 4294901760
    %337 = vmatpush.msra.mxu0 %v336
    %v338 = vand.u32 %v64, 4294901760
    %v339 = vsub.f32 %v64, %v338
    %v340 = vand.u32 %v339, 4294901760
    %341 = vmatpush.msra.mxu0 %v340
    %v342 = vand.u32 %v63, 4294901760
    %v343 = vsub.f32 %v63, %v342
    %v344 = vand.u32 %v343, 4294901760
    %345 = vmatpush.msra.mxu0 %v344
    %v346 = vand.u32 %v62, 4294901760
    %v347 = vsub.f32 %v62, %v346
    %v348 = vand.u32 %v347, 4294901760
    %349 = vmatpush.msra.mxu0 %v348
    %v350 = vand.u32 %v61, 4294901760
    %v351 = vsub.f32 %v61, %v350
    %v352 = vand.u32 %v351, 4294901760
    %353 = vmatpush.msra.mxu0 %v352
    %v354 = vand.u32 %v60, 4294901760
    %v355 = vsub.f32 %v60, %v354
    %v356 = vand.u32 %v355, 4294901760
    %357 = vmatpush.msra.mxu0 %v356
    %v358 = vand.u32 %v59, 4294901760
    %v359 = vsub.f32 %v59, %v358
    %v360 = vand.u32 %v359, 4294901760
    %361 = vmatpush.msra.mxu0 %v360
    %v362 = vand.u32 %v58, 4294901760
    %v363 = vsub.f32 %v58, %v362
    %v364 = vand.u32 %v363, 4294901760
    %365 = vmatpush.msra.mxu0 %v364
    %v366 = vand.u32 %v57, 4294901760
    %v367 = vsub.f32 %v57, %v366
    %v368 = vand.u32 %v367, 4294901760
    %369 = vmatpush.msra.mxu0 %v368
    %v370 = vand.u32 %v56, 4294901760
    %v371 = vsub.f32 %v56, %v370
    %v372 = vand.u32 %v371, 4294901760
    %373 = vmatpush.msra.mxu0 %v372
    %v374 = vand.u32 %v55, 4294901760
    %v375 = vsub.f32 %v55, %v374
    %v376 = vand.u32 %v375, 4294901760
    %377 = vmatpush.msra.mxu0 %v376
    %v378 = vand.u32 %v54, 4294901760
    %v379 = vsub.f32 %v54, %v378
    %v380 = vand.u32 %v379, 4294901760
    %381 = vmatpush.msra.mxu0 %v380
    %v382 = vand.u32 %v53, 4294901760
    %v383 = vsub.f32 %v53, %v382
    %v384 = vand.u32 %v383, 4294901760
    %385 = vmatpush.msra.mxu0 %v384
    %v386 = vand.u32 %v52, 4294901760
    %v387 = vsub.f32 %v52, %v386
    %v388 = vand.u32 %v387, 4294901760
    %389 = vmatpush.msra.mxu0 %v388
    %v390 = vand.u32 %v50, 4294901760
    %391 = vmatmul.f32.gmra.mxu0 %v390
    %v392 = vpop.f32.mrf.mxu0
    %v393 = vadd.f32 %v318, %v392
    %v394 = vand.u32 %v51, 4294901760
    %395 = vmatmul.f32.gmra.mxu0 %v394
    %v396 = vpop.f32.mrf.mxu0
    %v397 = vadd.f32 %v324, %v396
    %398 = vdwg.mxu0
    %v399 = vand.u32 %v67, 4294901760
    %400 = vmatpush.msra.mxu0 %v399
    %v401 = vand.u32 %v66, 4294901760
    %402 = vmatpush.msra.mxu0 %v401
    %v403 = vand.u32 %v65, 4294901760
    %404 = vmatpush.msra.mxu0 %v403
    %v405 = vand.u32 %v64, 4294901760
    %406 = vmatpush.msra.mxu0 %v405
    %v407 = vand.u32 %v63, 4294901760
    %408 = vmatpush.msra.mxu0 %v407
    %v409 = vand.u32 %v62, 4294901760
    %410 = vmatpush.msra.mxu0 %v409
    %v411 = vand.u32 %v61, 4294901760
    %412 = vmatpush.msra.mxu0 %v411
    %v413 = vand.u32 %v60, 4294901760
    %414 = vmatpush.msra.mxu0 %v413
    %v415 = vand.u32 %v59, 4294901760
    %416 = vmatpush.msra.mxu0 %v415
    %v417 = vand.u32 %v58, 4294901760
    %418 = vmatpush.msra.mxu0 %v417
    %v419 = vand.u32 %v57, 4294901760
    %420 = vmatpush.msra.mxu0 %v419
    %v421 = vand.u32 %v56, 4294901760
    %422 = vmatpush.msra.mxu0 %v421
    %v423 = vand.u32 %v55, 4294901760
    %424 = vmatpush.msra.mxu0 %v423
    %v425 = vand.u32 %v54, 4294901760
    %426 = vmatpush.msra.mxu0 %v425
    %v427 = vand.u32 %v53, 4294901760
    %428 = vmatpush.msra.mxu0 %v427
    %v429 = vand.u32 %v52, 4294901760
    %430 = vmatpush.msra.mxu0 %v429
    %v431 = vand.u32 %v50, 4294901760
    %432 = vmatmul.f32.gmra.mxu0 %v431
    %v433 = vpop.f32.mrf.mxu0
    %v434 = vadd.f32 %v393, %v433
    %v435 = vand.u32 %v51, 4294901760
    %436 = vmatmul.f32.gmra.mxu0 %v435
    %v437 = vpop.f32.mrf.mxu0
    %v438 = vadd.f32 %v397, %v437
    %439 = vdwg.mxu0
    %v440 = vsub.f32 %v50, %v434
    %v441 = vsub.f32 %v51, %v438
    %v442 = vmul.f32 %v440, %v440
    %v443 = vmul.f32 %v441, %v441
    %v444 = vand.u32 %v67, 4294901760
    %445 = vmatpush.msra.mxu0 %v444
    %v446 = vand.u32 %v66, 4294901760
    %447 = vmatpush.msra.mxu0 %v446
    %v448 = vand.u32 %v65, 4294901760
    %449 = vmatpush.msra.mxu0 %v448
    %v450 = vand.u32 %v64, 4294901760
    %451 = vmatpush.msra.mxu0 %v450
    %v452 = vand.u32 %v63, 4294901760
    %453 = vmatpush.msra.mxu0 %v452
    %v454 = vand.u32 %v62, 4294901760
    %455 = vmatpush.msra.mxu0 %v454
    %v456 = vand.u32 %v61, 4294901760
    %457 = vmatpush.msra.mxu0 %v456
    %v458 = vand.u32 %v60, 4294901760
    %459 = vmatpush.msra.mxu0 %v458
    %v460 = vand.u32 %v59, 4294901760
    %461 = vmatpush.msra.mxu0 %v460
    %v462 = vand.u32 %v58, 4294901760
    %463 = vmatpush.msra.mxu0 %v462
    %v464 = vand.u32 %v57, 4294901760
    %465 = vmatpush.msra.mxu0 %v464
    %v466 = vand.u32 %v56, 4294901760
    %467 = vmatpush.msra.mxu0 %v466
    %v468 = vand.u32 %v55, 4294901760
    %469 = vmatpush.msra.mxu0 %v468
    %v470 = vand.u32 %v54, 4294901760
    %471 = vmatpush.msra.mxu0 %v470
    %v472 = vand.u32 %v53, 4294901760
    %473 = vmatpush.msra.mxu0 %v472
    %v474 = vand.u32 %v52, 4294901760
    %475 = vmatpush.msra.mxu0 %v474
    %v476 = vand.u32 %v442, 4294901760
    %v477 = vsub.f32 %v442, %v476
    %v478 = vand.u32 %v477, 4294901760
    %v479 = vsub.f32 %v477, %v478
    %v480 = vand.u32 %v479, 4294901760
    %481 = vmatmul.f32.gmra.mxu0 %v480
    %v482 = vpop.f32.mrf.mxu0
    %v483 = vadd.f32 1e-05, %v482
    %v484 = vand.u32 %v443, 4294901760
    %v485 = vsub.f32 %v443, %v484
    %v486 = vand.u32 %v485, 4294901760
    %v487 = vsub.f32 %v485, %v486
    %v488 = vand.u32 %v487, 4294901760
    %489 = vmatmul.f32.gmra.mxu0 %v488
    %v490 = vpop.f32.mrf.mxu0
    %v491 = vadd.f32 1e-05, %v490
    %492 = vdwg.mxu0
    %v493 = vand.u32 %v67, 4294901760
    %v494 = vsub.f32 %v67, %v493
    %v495 = vand.u32 %v494, 4294901760
    %v496 = vsub.f32 %v494, %v495
    %v497 = vand.u32 %v496, 4294901760
    %498 = vmatpush.msra.mxu0 %v497
    %v499 = vand.u32 %v66, 4294901760
    %v500 = vsub.f32 %v66, %v499
    %v501 = vand.u32 %v500, 4294901760
    %v502 = vsub.f32 %v500, %v501
    %v503 = vand.u32 %v502, 4294901760
    %504 = vmatpush.msra.mxu0 %v503
    %v505 = vand.u32 %v65, 4294901760
    %v506 = vsub.f32 %v65, %v505
    %v507 = vand.u32 %v506, 4294901760
    %v508 = vsub.f32 %v506, %v507
    %v509 = vand.u32 %v508, 4294901760
    %510 = vmatpush.msra.mxu0 %v509
    %v511 = vand.u32 %v64, 4294901760
    %v512 = vsub.f32 %v64, %v511
    %v513 = vand.u32 %v512, 4294901760
    %v514 = vsub.f32 %v512, %v513
    %v515 = vand.u32 %v514, 4294901760
    %516 = vmatpush.msra.mxu0 %v515
    %v517 = vand.u32 %v63, 4294901760
    %v518 = vsub.f32 %v63, %v517
    %v519 = vand.u32 %v518, 4294901760
    %v520 = vsub.f32 %v518, %v519
    %v521 = vand.u32 %v520, 4294901760
    %522 = vmatpush.msra.mxu0 %v521
    %v523 = vand.u32 %v62, 4294901760
    %v524 = vsub.f32 %v62, %v523
    %v525 = vand.u32 %v524, 4294901760
    %v526 = vsub.f32 %v524, %v525
    %v527 = vand.u32 %v526, 4294901760
    %528 = vmatpush.msra.mxu0 %v527
    %v529 = vand.u32 %v61, 4294901760
    %v530 = vsub.f32 %v61, %v529
    %v531 = vand.u32 %v530, 4294901760
    %v532 = vsub.f32 %v530, %v531
    %v533 = vand.u32 %v532, 4294901760
    %534 = vmatpush.msra.mxu0 %v533
    %v535 = vand.u32 %v60, 4294901760
    %v536 = vsub.f32 %v60, %v535
    %v537 = vand.u32 %v536, 4294901760
    %v538 = vsub.f32 %v536, %v537
    %v539 = vand.u32 %v538, 4294901760
    %540 = vmatpush.msra.mxu0 %v539
    %v541 = vand.u32 %v59, 4294901760
    %v542 = vsub.f32 %v59, %v541
    %v543 = vand.u32 %v542, 4294901760
    %v544 = vsub.f32 %v542, %v543
    %v545 = vand.u32 %v544, 4294901760
    %546 = vmatpush.msra.mxu0 %v545
    %v547 = vand.u32 %v58, 4294901760
    %v548 = vsub.f32 %v58, %v547
    %v549 = vand.u32 %v548, 4294901760
    %v550 = vsub.f32 %v548, %v549
    %v551 = vand.u32 %v550, 4294901760
    %552 = vmatpush.msra.mxu0 %v551
    %v553 = vand.u32 %v57, 4294901760
    %v554 = vsub.f32 %v57, %v553
    %v555 = vand.u32 %v554, 4294901760
    %v556 = vsub.f32 %v554, %v555
    %v557 = vand.u32 %v556, 4294901760
    %558 = vmatpush.msra.mxu0 %v557
    %v559 = vand.u32 %v56, 4294901760
    %v560 = vsub.f32 %v56, %v559
    %v561 = vand.u32 %v560, 4294901760
    %v562 = vsub.f32 %v560, %v561
    %v563 = vand.u32 %v562, 4294901760
    %564 = vmatpush.msra.mxu0 %v563
    %v565 = vand.u32 %v55, 4294901760
    %v566 = vsub.f32 %v55, %v565
    %v567 = vand.u32 %v566, 4294901760
    %v568 = vsub.f32 %v566, %v567
    %v569 = vand.u32 %v568, 4294901760
    %570 = vmatpush.msra.mxu0 %v569
    %v571 = vand.u32 %v54, 4294901760
    %v572 = vsub.f32 %v54, %v571
    %v573 = vand.u32 %v572, 4294901760
    %v574 = vsub.f32 %v572, %v573
    %v575 = vand.u32 %v574, 4294901760
    %576 = vmatpush.msra.mxu0 %v575
    %v577 = vand.u32 %v53, 4294901760
    %v578 = vsub.f32 %v53, %v577
    %v579 = vand.u32 %v578, 4294901760
    %v580 = vsub.f32 %v578, %v579
    %v581 = vand.u32 %v580, 4294901760
    %582 = vmatpush.msra.mxu0 %v581
    %v583 = vand.u32 %v52, 4294901760
    %v584 = vsub.f32 %v52, %v583
    %v585 = vand.u32 %v584, 4294901760
    %v586 = vsub.f32 %v584, %v585
    %v587 = vand.u32 %v586, 4294901760
    %588 = vmatpush.msra.mxu0 %v587
    %v589 = vand.u32 %v442, 4294901760
    %590 = vmatmul.f32.gmra.mxu0 %v589
    %v591 = vpop.f32.mrf.mxu0
    %v592 = vadd.f32 %v483, %v591
    %v593 = vand.u32 %v443, 4294901760
    %594 = vmatmul.f32.gmra.mxu0 %v593
    %v595 = vpop.f32.mrf.mxu0
    %v596 = vadd.f32 %v491, %v595
    %597 = vdwg.mxu0
    %v598 = vand.u32 %v67, 4294901760
    %v599 = vsub.f32 %v67, %v598
    %600 = vmatpush.msra.mxu0 %v599
    %v601 = vand.u32 %v66, 4294901760
    %v602 = vsub.f32 %v66, %v601
    %603 = vmatpush.msra.mxu0 %v602
    %v604 = vand.u32 %v65, 4294901760
    %v605 = vsub.f32 %v65, %v604
    %606 = vmatpush.msra.mxu0 %v605
    %v607 = vand.u32 %v64, 4294901760
    %v608 = vsub.f32 %v64, %v607
    %609 = vmatpush.msra.mxu0 %v608
    %v610 = vand.u32 %v63, 4294901760
    %v611 = vsub.f32 %v63, %v610
    %612 = vmatpush.msra.mxu0 %v611
    %v613 = vand.u32 %v62, 4294901760
    %v614 = vsub.f32 %v62, %v613
    %615 = vmatpush.msra.mxu0 %v614
    %v616 = vand.u32 %v61, 4294901760
    %v617 = vsub.f32 %v61, %v616
    %618 = vmatpush.msra.mxu0 %v617
    %v619 = vand.u32 %v60, 4294901760
    %v620 = vsub.f32 %v60, %v619
    %621 = vmatpush.msra.mxu0 %v620
    %v622 = vand.u32 %v59, 4294901760
    %v623 = vsub.f32 %v59, %v622
    %624 = vmatpush.msra.mxu0 %v623
    %v625 = vand.u32 %v58, 4294901760
    %v626 = vsub.f32 %v58, %v625
    %627 = vmatpush.msra.mxu0 %v626
    %v628 = vand.u32 %v57, 4294901760
    %v629 = vsub.f32 %v57, %v628
    %630 = vmatpush.msra.mxu0 %v629
    %v631 = vand.u32 %v56, 4294901760
    %v632 = vsub.f32 %v56, %v631
    %633 = vmatpush.msra.mxu0 %v632
    %v634 = vand.u32 %v55, 4294901760
    %v635 = vsub.f32 %v55, %v634
    %636 = vmatpush.msra.mxu0 %v635
    %v637 = vand.u32 %v54, 4294901760
    %v638 = vsub.f32 %v54, %v637
    %639 = vmatpush.msra.mxu0 %v638
    %v640 = vand.u32 %v53, 4294901760
    %v641 = vsub.f32 %v53, %v640
    %642 = vmatpush.msra.mxu0 %v641
    %v643 = vand.u32 %v52, 4294901760
    %v644 = vsub.f32 %v52, %v643
    %645 = vmatpush.msra.mxu0 %v644
    %v646 = vand.u32 %v442, 4294901760
    %v647 = vsub.f32 %v442, %v646
    %648 = vmatmul.f32.gmra.mxu0 %v647
    %v649 = vpop.f32.mrf.mxu0
    %v650 = vadd.f32 %v592, %v649
    %v651 = vand.u32 %v443, 4294901760
    %v652 = vsub.f32 %v443, %v651
    %653 = vmatmul.f32.gmra.mxu0 %v652
    %v654 = vpop.f32.mrf.mxu0
    %v655 = vadd.f32 %v596, %v654
    %656 = vdwg.mxu0
    %v657 = vand.u32 %v67, 4294901760
    %658 = vmatpush.msra.mxu0 %v657
    %v659 = vand.u32 %v66, 4294901760
    %660 = vmatpush.msra.mxu0 %v659
    %v661 = vand.u32 %v65, 4294901760
    %662 = vmatpush.msra.mxu0 %v661
    %v663 = vand.u32 %v64, 4294901760
    %664 = vmatpush.msra.mxu0 %v663
    %v665 = vand.u32 %v63, 4294901760
    %666 = vmatpush.msra.mxu0 %v665
    %v667 = vand.u32 %v62, 4294901760
    %668 = vmatpush.msra.mxu0 %v667
    %v669 = vand.u32 %v61, 4294901760
    %670 = vmatpush.msra.mxu0 %v669
    %v671 = vand.u32 %v60, 4294901760
    %672 = vmatpush.msra.mxu0 %v671
    %v673 = vand.u32 %v59, 4294901760
    %674 = vmatpush.msra.mxu0 %v673
    %v675 = vand.u32 %v58, 4294901760
    %676 = vmatpush.msra.mxu0 %v675
    %v677 = vand.u32 %v57, 4294901760
    %678 = vmatpush.msra.mxu0 %v677
    %v679 = vand.u32 %v56, 4294901760
    %680 = vmatpush.msra.mxu0 %v679
    %v681 = vand.u32 %v55, 4294901760
    %682 = vmatpush.msra.mxu0 %v681
    %v683 = vand.u32 %v54, 4294901760
    %684 = vmatpush.msra.mxu0 %v683
    %v685 = vand.u32 %v53, 4294901760
    %686 = vmatpush.msra.mxu0 %v685
    %v687 = vand.u32 %v52, 4294901760
    %688 = vmatpush.msra.mxu0 %v687
    %v689 = vand.u32 %v442, 4294901760
    %v690 = vsub.f32 %v442, %v689
    %v691 = vand.u32 %v690, 4294901760
    %692 = vmatmul.f32.gmra.mxu0 %v691
    %v693 = vpop.f32.mrf.mxu0
    %v694 = vadd.f32 %v650, %v693
    %v695 = vand.u32 %v443, 4294901760
    %v696 = vsub.f32 %v443, %v695
    %v697 = vand.u32 %v696, 4294901760
    %698 = vmatmul.f32.gmra.mxu0 %v697
    %v699 = vpop.f32.mrf.mxu0
    %v700 = vadd.f32 %v655, %v699
    %701 = vdwg.mxu0
    %v702 = vand.u32 %v67, 4294901760
    %v703 = vsub.f32 %v67, %v702
    %v704 = vand.u32 %v703, 4294901760
    %705 = vmatpush.msra.mxu0 %v704
    %v706 = vand.u32 %v66, 4294901760
    %v707 = vsub.f32 %v66, %v706
    %v708 = vand.u32 %v707, 4294901760
    %709 = vmatpush.msra.mxu0 %v708
    %v710 = vand.u32 %v65, 4294901760
    %v711 = vsub.f32 %v65, %v710
    %v712 = vand.u32 %v711, 4294901760
    %713 = vmatpush.msra.mxu0 %v712
    %v714 = vand.u32 %v64, 4294901760
    %v715 = vsub.f32 %v64, %v714
    %v716 = vand.u32 %v715, 4294901760
    %717 = vmatpush.msra.mxu0 %v716
    %v718 = vand.u32 %v63, 4294901760
    %v719 = vsub.f32 %v63, %v718
    %v720 = vand.u32 %v719, 4294901760
    %721 = vmatpush.msra.mxu0 %v720
    %v722 = vand.u32 %v62, 4294901760
    %v723 = vsub.f32 %v62, %v722
    %v724 = vand.u32 %v723, 4294901760
    %725 = vmatpush.msra.mxu0 %v724
    %v726 = vand.u32 %v61, 4294901760
    %v727 = vsub.f32 %v61, %v726
    %v728 = vand.u32 %v727, 4294901760
    %729 = vmatpush.msra.mxu0 %v728
    %v730 = vand.u32 %v60, 4294901760
    %v731 = vsub.f32 %v60, %v730
    %v732 = vand.u32 %v731, 4294901760
    %733 = vmatpush.msra.mxu0 %v732
    %v734 = vand.u32 %v59, 4294901760
    %v735 = vsub.f32 %v59, %v734
    %v736 = vand.u32 %v735, 4294901760
    %737 = vmatpush.msra.mxu0 %v736
    %v738 = vand.u32 %v58, 4294901760
    %v739 = vsub.f32 %v58, %v738
    %v740 = vand.u32 %v739, 4294901760
    %741 = vmatpush.msra.mxu0 %v740
    %v742 = vand.u32 %v57, 4294901760
    %v743 = vsub.f32 %v57, %v742
    %v744 = vand.u32 %v743, 4294901760
    %745 = vmatpush.msra.mxu0 %v744
    %v746 = vand.u32 %v56, 4294901760
    %v747 = vsub.f32 %v56, %v746
    %v748 = vand.u32 %v747, 4294901760
    %749 = vmatpush.msra.mxu0 %v748
    %v750 = vand.u32 %v55, 4294901760
    %v751 = vsub.f32 %v55, %v750
    %v752 = vand.u32 %v751, 4294901760
    %753 = vmatpush.msra.mxu0 %v752
    %v754 = vand.u32 %v54, 4294901760
    %v755 = vsub.f32 %v54, %v754
    %v756 = vand.u32 %v755, 4294901760
    %757 = vmatpush.msra.mxu0 %v756
    %v758 = vand.u32 %v53, 4294901760
    %v759 = vsub.f32 %v53, %v758
    %v760 = vand.u32 %v759, 4294901760
    %761 = vmatpush.msra.mxu0 %v760
    %v762 = vand.u32 %v52, 4294901760
    %v763 = vsub.f32 %v52, %v762
    %v764 = vand.u32 %v763, 4294901760
    %765 = vmatpush.msra.mxu0 %v764
    %v766 = vand.u32 %v442, 4294901760
    %767 = vmatmul.f32.gmra.mxu0 %v766
    %v768 = vpop.f32.mrf.mxu0
    %v769 = vadd.f32 %v694, %v768
    %v770 = vand.u32 %v443, 4294901760
    %771 = vmatmul.f32.gmra.mxu0 %v770
    %v772 = vpop.f32.mrf.mxu0
    %v773 = vadd.f32 %v700, %v772
    %774 = vdwg.mxu0
    %v775 = vand.u32 %v67, 4294901760
    %776 = vmatpush.msra.mxu0 %v775
    %v777 = vand.u32 %v66, 4294901760
    %778 = vmatpush.msra.mxu0 %v777
    %v779 = vand.u32 %v65, 4294901760
    %780 = vmatpush.msra.mxu0 %v779
    %v781 = vand.u32 %v64, 4294901760
    %782 = vmatpush.msra.mxu0 %v781
    %v783 = vand.u32 %v63, 4294901760
    %784 = vmatpush.msra.mxu0 %v783
    %v785 = vand.u32 %v62, 4294901760
    %786 = vmatpush.msra.mxu0 %v785
    %v787 = vand.u32 %v61, 4294901760
    %788 = vmatpush.msra.mxu0 %v787
    %v789 = vand.u32 %v60, 4294901760
    %790 = vmatpush.msra.mxu0 %v789
    %v791 = vand.u32 %v59, 4294901760
    %792 = vmatpush.msra.mxu0 %v791
    %v793 = vand.u32 %v58, 4294901760
    %794 = vmatpush.msra.mxu0 %v793
    %v795 = vand.u32 %v57, 4294901760
    %796 = vmatpush.msra.mxu0 %v795
    %v797 = vand.u32 %v56, 4294901760
    %798 = vmatpush.msra.mxu0 %v797
    %v799 = vand.u32 %v55, 4294901760
    %800 = vmatpush.msra.mxu0 %v799
    %v801 = vand.u32 %v54, 4294901760
    %802 = vmatpush.msra.mxu0 %v801
    %v803 = vand.u32 %v53, 4294901760
    %804 = vmatpush.msra.mxu0 %v803
    %v805 = vand.u32 %v52, 4294901760
    %806 = vmatpush.msra.mxu0 %v805
    %v807 = vand.u32 %v442, 4294901760
    %808 = vmatmul.f32.gmra.mxu0 %v807
    %v809 = vpop.f32.mrf.mxu0
    %v810 = vadd.f32 %v769, %v809
    %v811 = vand.u32 %v443, 4294901760
    %812 = vmatmul.f32.gmra.mxu0 %v811
    %v813 = vpop.f32.mrf.mxu0
    %v814 = vadd.f32 %v773, %v813
    %815 = vdwg.mxu0
    %v816 = vrsqrt.pop %v810
    %v817 = vmul.f32 %v816, %v810
    %v818 = vmul.f32 %v817, %v816
    %v819 = vmul.f32 0.5, %v818
    %v820 = vsub.f32 1.5, %v819
    %v821 = vmul.f32 %v816, %v820
    %vm822 = vweird.f32 %v810
    %vm823 = vweird.f32 %v816
    %vm824 = vmor %vm822, %vm823
    %v825 = vsel %vm824, %v816, %v821
    %v826 = vrsqrt.pop %v814
    %v827 = vmul.f32 %v826, %v814
    %v828 = vmul.f32 %v827, %v826
    %v829 = vmul.f32 0.5, %v828
    %v830 = vsub.f32 1.5, %v829
    %v831 = vmul.f32 %v826, %v830
    %vm832 = vweird.f32 %v814
    %vm833 = vweird.f32 %v826
    %vm834 = vmor %vm832, %vm833
    %v835 = vsel %vm834, %v826, %v831
    %v836 = vld [vmem:[%s2] sm:$0x1]
    %v837 = vmul.f32 %v440, %v825
    %v838 = vmul.f32 %v441, %v835
    %v840 = vperm.slane %v836, 0
    %v842 = vmul.f32 %v840, %v837
    %v843 = vmul.f32 %v840, %v838
    %v844 = vld [vmem:[%s3] sm:$0x1]
    %v846 = vperm.slane %v844, 0
    %v848 = vadd.f32 %v842, %v846
    %v849 = vadd.f32 %v843, %v846
    %850 = vst [vmem:[#allocation7] sm:$0xff] %v848
    %851 = vst [vmem:[#allocation7 + $0x8] sm:$0xff] %v849
    // Predicated region
    $region26: #{tpu_custom_call.1} parent=1 // pred_check
      _
    $region27: #{tpu_custom_call.1} parent=1 // pred_check_branch
      %853 = sbr.rel (0) target = $region29
    $region28: #{tpu_custom_call.1} parent=1 // pred_region
      %855 = vsyncadd [#allocation4], 0
      %s856 = sshll.u32 [#allocation7], 4
      %s857 = int_to_ptr.vmem [resolvable:$true] %s856
      %s858 = sshll.u32 %s4, 4
      %s859 = int_to_ptr.hbm [resolvable:$true] %s858
      %864 = dma.vmem_to_hbm [thread:$0]  %s857, 256, %s859, [#allocation4], 128, 128, 8
    $region29: #{tpu_custom_call.1} parent=1 // pred_fallthru
      _
    // Predicated region
    $region30: #{tpu_custom_call.1} parent=1 // pred_check
      _
    $region31: #{tpu_custom_call.1} parent=1 // pred_check_branch
      %866 = sbr.rel (0) target = $region33
    $region32: #{tpu_custom_call.1} parent=1 // pred_region
      %868 = dma.done [#allocation4], 256
    $region33: #{tpu_custom_call.1} parent=1 // pred_fallthru
      _
    %869 = vsyncpa [#allocation3], 1
    %870 = vsyncpa [#allocation6], 1
    %871 = vsyncpa [#allocation4], 1

</llo_original>
